<compile_context>
chip_gen: v7x
topology: tpu7x:2x2x1
jax: 0.10.0
libtpu: 0.0.40
codegen_flags: <defaults>
</compile_context>

<pallas_src>
from math import sqrt

import jax
import jax.numpy as jnp
from jax.experimental import pallas as pl
from jax.experimental.pallas import tpu as pltpu


NEG_INF = -1e30            # finite on purpose: 0 * NEG_INF stays finite
LANES = 128
TILE_M = 256               # batch rows per MXU pass (full M-width on v6e/v7x)
MAX_VOCAB_TILE = 8192      # cap for streamed vocab tiles


def _round_up(x, m):
    return (x + m - 1) // m * m


# --------------------------------------------------------------------------
# Generation-aware VMEM budgeting
# --------------------------------------------------------------------------
_VMEM_BUDGET = None


def _vmem_budget():
    """~78% of physical per-core VMEM (v5e/v6e: ~100 MiB, v7x: ~50 MiB)."""
    global _VMEM_BUDGET
    if _VMEM_BUDGET is None:
        cap = 64 << 20                       # conservative default (v7x)
        try:
            info = pltpu.get_tpu_info()
            cap = int(getattr(info, "vmem_capacity_bytes", cap) or cap)
        except Exception:
            pass
        _VMEM_BUDGET = min(int(cap * 0.78), 100 << 20)
    return _VMEM_BUDGET


def _live_set_bytes(tm, k, tv, nbuf):
    """Per-grid-step VMEM live set for the CE kernel (bytes)."""
    return (4 * tm * k                       # activation tile, bf16, x2 bufs
            + 16 * tm                        # label + mask tiles, x2 bufs
            + nbuf * (2 * k * tv + 4 * tv)   # weight (bf16) + bias (f32)
            + 4 * tm * tv                    # f32 logits working set
            + 12 * tm                        # m / l / picked scratch
            + 8 * LANES)                     # output block


def _pick_tv(k, c, tm):
    """Pick (tv, C_pad) for a component with contraction dim k and c cols."""
    budget = _vmem_budget()
    c128 = _round_up(max(c, 1), LANES)
    # Full width fits -> constant index map, W2 grid-resident (single buffer),
    # num_v == 1 (no online-LSE rounds, no HBM re-streaming per batch tile).
    if _live_set_bytes(tm, k, c128, nbuf=1) <= budget:
        return c128, c128
    # Streamed: largest 128-multiple tile whose double-buffered set fits.
    base = 4 * tm * k + 16 * tm + 12 * tm + 8 * LANES
    per_col = 4 * k + 8 + 4 * tm
    tv = (budget - base) // per_col // LANES * LANES
    tv = int(max(LANES, min(tv, MAX_VOCAB_TILE, c128)))
    return tv, _round_up(c128, tv)


def _vmem_limit_bytes(tm, k, tv, num_v):
    nbuf = 1 if num_v == 1 else 2
    need = int(_live_set_bytes(tm, k, tv, nbuf) * 1.5) + (4 << 20)
    return max(16 << 20, min(need, _vmem_budget()))


def _pick_tm(batch, tile_m=TILE_M):
    """tm: full MXU M-width for large batches, shrink for tiny ones.
    TODO(synk): on v7x with tile_m <= B < 2*tile_m one TensorCore idles on the
    'parallel' batch axis; a vocab-split + JAX-side LSE combine would fix it."""
    b8 = max(_round_up(batch, 8), 8)
    return b8 if b8 <= tile_m else tile_m


# --------------------------------------------------------------------------
# Kernel factory: masked softmax-CE over a single linear projection
# --------------------------------------------------------------------------
def _make_ce_kernel(num_vocab_tiles, tv):
    def kernel(x_ref, lbl_ref, msk_ref, w_ref, b_ref, out_ref,
               m_ref, l_ref, p_ref):
        v = pl.program_id(1)

        @pl.when(v == 0)
        def _init():
            m_ref[...] = jnp.full(m_ref.shape, NEG_INF, jnp.float32)
            l_ref[...] = jnp.zeros(l_ref.shape, jnp.float32)
            p_ref[...] = jnp.zeros(p_ref.shape, jnp.float32)

        # MXU: bf16 operands, f32 accumulation.
        logits = jnp.dot(x_ref[...], w_ref[...],
                         preferred_element_type=jnp.float32)   # [tm, tv]
        logits = logits + b_ref[...]      # bias / -1e30 on padded columns
        # (Folding bias into W2 via a constant-1 activation column would move
        #  this add onto the MXU but costs bias precision in bf16 — skipped.)

        # ---- online LSE update (flash-softmax style), all f32 ----
        m_prev = m_ref[...]
        m_new = jnp.maximum(m_prev, jnp.max(logits, axis=-1, keepdims=True))
        l_ref[...] = (l_ref[...] * jnp.exp(m_prev - m_new)
                      + jnp.sum(jnp.exp(logits - m_new), axis=-1,
                                keepdims=True))
        m_ref[...] = m_new

        # ---- picked logit: tile-local label comparison (no [tm,tv] offset
        #      add on the VPU); only the owning vocab tile matches ----
        lbl_local = lbl_ref[...] - v * tv                     # [tm, 1] int32
        col = jax.lax.broadcasted_iota(jnp.int32, logits.shape, 1)
        p_ref[...] += jnp.sum(jnp.where(col == lbl_local, logits, 0.0),
                              axis=-1, keepdims=True)

        @pl.when(v == num_vocab_tiles - 1)
        def _finalize():
            loss = (m_ref[...] + jnp.log(l_ref[...]) - p_ref[...])  # [tm, 1]
            loss = loss * msk_ref[...]        # zero padded / out-of-cluster
            s = jnp.sum(loss, axis=0, keepdims=True)                # [1, 1]
            out_ref[...] = jnp.broadcast_to(s.reshape(1, 1, 1), out_ref.shape)

    return kernel


# --------------------------------------------------------------------------
# Per-component pallas_call wrapper
# --------------------------------------------------------------------------
def _ce_partial(act, labels, mask, w, bias, *, tm, tv):
    """Returns [num_batch_tiles] f32 per-batch-tile partial CE sums.

    act:    [B_pad, K]  bf16 (x for the head, hoisted hidden h for tails)
    labels: [B_pad, 1]  int32 (global column index within this component)
    mask:   [B_pad, 1]  f32 row mask
    w:      [K, C_pad]  bf16, bias: [1, C_pad] f32 (bias + -1e30 col padding)
    """
    b_pad, k = act.shape
    c_pad = w.shape[1]
    assert b_pad % tm == 0 and c_pad % tv == 0
    num_b, num_v = b_pad // tm, c_pad // tv

    row_map = lambda b, v: (b, 0)
    if num_v == 1:
        w_map = lambda b, v: (0, 0)       # constant -> grid-resident weight
    else:
        w_map = lambda b, v: (0, v)
        # TODO(synk): if profiling shows the streamed head is DMA-exposed,
        # sweep pipeline_mode=pl.Buffered(3) on the weight BlockSpec.

    in_specs = [
        pl.BlockSpec((tm, k), row_map),                  # activation (bf16)
        pl.BlockSpec((tm, 1), row_map),                  # labels (int32)
        pl.BlockSpec((tm, 1), row_map),                  # row mask (f32)
        pl.BlockSpec((k, tv), w_map),                    # weight tile (bf16)
        pl.BlockSpec((1, tv), w_map),                    # bias / col mask
    ]

    # Honest traffic estimate: weights re-streamed once per batch tile under
    # the (batch-outer, vocab-inner) grid unless resident (num_v == 1).
    w_reads = 1 if num_v == 1 else num_b
    bytes_accessed = int(act.size * 2 + labels.size * 4 + mask.size * 4
                         + w_reads * (w.size * 2 + bias.size * 4)
                         + num_b * LANES * 4)
    cost = pl.CostEstimate(
        flops=int(2 * b_pad * k * c_pad),
        transcendentals=int(b_pad * c_pad + 2 * b_pad),
        bytes_accessed=bytes_accessed)

    out = pl.pallas_call(
        _make_ce_kernel(num_v, tv),
        out_shape=jax.ShapeDtypeStruct((num_b, 1, LANES), jnp.float32),
        grid_spec=pltpu.PrefetchScalarGridSpec(
            num_scalar_prefetch=0,
            grid=(num_b, num_v),
            in_specs=in_specs,
            out_specs=pl.BlockSpec((1, 1, LANES), lambda b, v: (b, 0, 0)),
            scratch_shapes=[pltpu.VMEM((tm, 1), jnp.float32)] * 3),
        compiler_params=pltpu.CompilerParams(
            dimension_semantics=("parallel", "arbitrary"),
            vmem_limit_bytes=_vmem_limit_bytes(tm, k, tv, num_v)),
        cost_estimate=cost,
    )(act, labels, mask, w, bias)
    return out[:, 0, 0]


# --------------------------------------------------------------------------
# One-time parameter preparation (transpose / pad / cast) — NOT per step
# --------------------------------------------------------------------------
def prepare_adaptive_softmax_params(head_w, head_b, tail_params, cutoff,
                                    *, tile_m=TILE_M):
    """head_w: [O, D], head_b: [O], tail_params: list of (w1 [H, D], w2 [C, H])
    in PyTorch Linear layout.  Returns padded, transposed bf16 projection
    weights, f32 bias / column-mask rows (-1e30 on padded columns), per-
    component vocab tiles, and the raw f32 W1 (applied in XLA, hoisted)."""
    n_tails = len(cutoff) - 1
    o, d = head_w.shape
    d_pad = _round_up(d, LANES)

    def pad2(a, r, c):
        return jnp.pad(a, ((0, r - a.shape[0]), (0, c - a.shape[1])))

    # ---- head ----
    head_tv, o_pad = _pick_tv(d_pad, o, tile_m)
    head_wt = pad2(head_w.T.astype(jnp.bfloat16), d_pad, o_pad)
    head_bias = jnp.full((1, o_pad), NEG_INF, jnp.float32)
    head_bias = head_bias.at[0, :o].set(head_b.astype(jnp.float32))

    # ---- tails ----
    tails = []
    for i in range(n_tails):
        w1, w2 = tail_params[i]                 # [H, D], [C, H]
        h, c = w1.shape[0], w2.shape[0]
        h_pad = _round_up(h, LANES)
        tv, c_pad = _pick_tv(h_pad, c, tile_m)
        w2t = pad2(w2.T.astype(jnp.bfloat16), h_pad, c_pad)     # [H_pad, C_pad]
        colmask = jnp.full((1, c_pad), NEG_INF, jnp.float32)
        colmask = colmask.at[0, :c].set(0.0)
        # W1 stays f32 / un-padded: the hidden projection is hoisted to XLA.
        tails.append({"w1": w1.astype(jnp.float32), "w2": w2t,
                      "colmask": colmask, "tv": tv, "H_pad": h_pad})

    return {"D": d, "D_pad": d_pad,
            "head_w": head_wt, "head_b": head_bias, "head_tv": head_tv,
            "tails": tails, "cutoff": tuple(int(x) for x in cutoff)}


# --------------------------------------------------------------------------
# Forward pass (loss)
# --------------------------------------------------------------------------
def adaptive_softmax_loss(w_in, target, params, *, tile_m=TILE_M):
    cutoff = params["cutoff"]
    n_tails = len(cutoff) - 1
    batch, d = w_in.shape
    d_pad = params["D_pad"]
    tm = _pick_tm(batch, tile_m)
    b_pad = _round_up(batch, tm)

    x = jnp.pad(w_in.astype(jnp.bfloat16), ((0, b_pad - batch), (0, d_pad - d)))
    tgt = jnp.pad(target.astype(jnp.int32), (0, b_pad - batch))
    valid = jnp.arange(b_pad) < batch
    valid_f = valid.astype(jnp.float32).reshape(b_pad, 1)

    # head labels: remap in-cluster targets to their cluster token
    first_target = tgt
    for i in range(n_tails):
        in_c = (tgt >= cutoff[i]) & (tgt < cutoff[i + 1])
        first_target = jnp.where(in_c, jnp.int32(cutoff[0] + i), first_target)

    total = _ce_partial(
        x, first_target.reshape(b_pad, 1), valid_f,
        params["head_w"], params["head_b"],
        tm=tm, tv=params["head_tv"]).sum()

    for i in range(n_tails):
        t = params["tails"][i]
        h_dim = t["w1"].shape[0]
        # Hidden projection hoisted to XLA: tiny f32 matmul off the kernel's
        # critical path; cast to bf16 only for the big second matmul.
        h = w_in.astype(jnp.float32) @ t["w1"].T                 # [B, H] f32
        h = jnp.pad(h.astype(jnp.bfloat16),
                    ((0, b_pad - batch), (0, t["H_pad"] - h_dim)))
        in_c = (tgt >= cutoff[i]) & (tgt < cutoff[i + 1]) & valid
        labels = (tgt - jnp.int32(cutoff[i])).reshape(b_pad, 1)
        total = total + _ce_partial(
            h, labels, in_c.astype(jnp.float32).reshape(b_pad, 1),
            t["w2"], t["colmask"], tm=tm, tv=t["tv"]).sum()

    return total / jnp.float32(batch)


# --------------------------------------------------------------------------
# Pure-JAX f32 reference (mirrors the PyTorch forward, masked formulation)
# --------------------------------------------------------------------------
def reference_loss(w_in, target, head_w, head_b, tail_params, cutoff):
    batch = w_in.shape[0]
    n_tails = len(cutoff) - 1

    def ce_sum(logits, labels, row_mask=None):
        lse = jax.scipy.special.logsumexp(logits, axis=-1)
        picked = jnp.take_along_axis(logits, labels[:, None], axis=-1)[:, 0]
        loss = lse - picked
        if row_mask is not None:
            loss = jnp.where(row_mask, loss, 0.0)
        return jnp.sum(loss)

    first_target = target
    for i in range(n_tails):
        m = (target >= cutoff[i]) & (target < cutoff[i + 1])
        first_target = jnp.where(m, cutoff[0] + i, first_target)

    total = ce_sum(w_in @ head_w.T + head_b, first_target)
    for i in range(n_tails):
        w1, w2 = tail_params[i]
        tail_logits = (w_in @ w1.T) @ w2.T
        m = (target >= cutoff[i]) & (target < cutoff[i + 1])
        total += ce_sum(tail_logits, target - cutoff[i], row_mask=m)
    return total / batch


if __name__ == "__main__":
    input_size = 32
    cutoff = [8, 16, 32]       # head covers [0,8), tails cover [8,16), [16,32)
    batch = 8
    n_tails = len(cutoff) - 1
    output_size = cutoff[0] + n_tails

    key = jax.random.PRNGKey(0)
    keys = jax.random.split(key, 4 + 2 * n_tails)
    k_x, k_t, k_hw, k_hb = keys[:4]
    k_tails = keys[4:]

    w_in = jax.random.normal(k_x, (batch, input_size), jnp.float32)
    target = jax.random.randint(k_t, (batch,), 0, cutoff[-1], jnp.int32)

    # Deterministic xavier-normal-style init (matches rand_ini intent).
    head_w = jax.random.normal(k_hw, (output_size, input_size), jnp.float32) \
        * sqrt(2.0 / (input_size + output_size))
    head_b = jax.random.normal(k_hb, (output_size,), jnp.float32) * 0.01

    tail_params = []
    for i in range(n_tails):
        hid = input_size // 4 ** (i + 1)
        csz = cutoff[i + 1] - cutoff[i]
        w1 = jax.random.normal(k_tails[2 * i], (hid, input_size), jnp.float32) \
            * sqrt(2.0 / (input_size + hid))
        w2 = jax.random.normal(k_tails[2 * i + 1], (csz, hid), jnp.float32) \
            * sqrt(2.0 / (hid + csz))
        tail_params.append((w1, w2))

    # One-time weight preparation (transpose / pad / bf16 cast / tv choice).
    params = prepare_adaptive_softmax_params(head_w, head_b, tail_params,
                                             cutoff)

    loss_fn = jax.jit(lambda x, t: adaptive_softmax_loss(x, t, params))
    loss = jax.block_until_ready(loss_fn(w_in, target))

    ref = reference_loss(w_in, target, head_w, head_b, tail_params, cutoff)
    # bf16 matmul operands (f32 accumulation) -> slightly looser tolerance.
    assert jnp.allclose(loss, ref, rtol=2e-2, atol=2e-2), (loss, ref)

    # TODO(synk): log_prob() inference helper of the module is not translated
    # (only forward() is required); it would reuse the same tiled kernels.
    print("KERNEL_OK")
</pallas_src>

<mosaic_0001>
module attributes {stable_mosaic.version = 11 : i64} {
  func.func @kernel(%arg0: i32, %arg1: i32, %arg2: memref<8x128xbf16, #tpu.memory_space<vmem>>, %arg3: memref<8x1xi32, #tpu.memory_space<vmem>>, %arg4: memref<8x1xf32, #tpu.memory_space<vmem>>, %arg5: memref<128x128xbf16, #tpu.memory_space<vmem>>, %arg6: memref<1x128xf32, #tpu.memory_space<vmem>>, %arg7: memref<1x1x128xf32, #tpu.memory_space<vmem>>, %arg8: memref<8x1xf32, #tpu.memory_space<vmem>>, %arg9: memref<8x1xf32, #tpu.memory_space<vmem>>, %arg10: memref<8x1xf32, #tpu.memory_space<vmem>>) attributes {dimension_semantics = [#tpu.dimension_semantics<parallel>, #tpu.dimension_semantics<arbitrary>], iteration_bounds = array<i64: 1, 1>, scalar_prefetch = 0 : i64, scratch_operands = 3 : i64, tpu.core_type = #tpu.core_type<tc>, window_params = [{transform_indices = @transform_0, window_bounds = array<i64: 8, 128>}, {transform_indices = @transform_1, window_bounds = array<i64: 8, 1>}, {transform_indices = @transform_2, window_bounds = array<i64: 8, 1>}, {pipeline_mode = #tpu.pipeline_mode<synchronous>, transform_indices = @transform_3, window_bounds = array<i64: 128, 128>}, {pipeline_mode = #tpu.pipeline_mode<synchronous>, transform_indices = @transform_4, window_bounds = array<i64: 1, 128>}, {transform_indices = @transform_5, window_bounds = array<i64: 1, 1, 128>}]} {
    %c0_i32 = arith.constant 0 : i32
    %0 = arith.cmpi eq, %arg1, %c0_i32 : i32
    %1 = arith.extui %0 : i1 to i32
    %c0_i32_0 = arith.constant 0 : i32
    %2 = arith.cmpi ne, %1, %c0_i32_0 : i32
    scf.if %2 {
      %cst_26 = arith.constant -1.000000e+30 : f32
      %42 = vector.broadcast %cst_26 : f32 to vector<8x1xf32>
      %c0_27 = arith.constant 0 : index
      %c0_28 = arith.constant 0 : index
      %43 = vector.load %arg8[%c0_27, %c0_28] : memref<8x1xf32, #tpu.memory_space<vmem>>, vector<8x1xf32>
      tpu.vector_store %arg8[%c0_27, %c0_28], %42 {strides = array<i32>} : memref<8x1xf32, #tpu.memory_space<vmem>>, vector<8x1xf32>,
      %cst_29 = arith.constant 0.000000e+00 : f32
      %44 = vector.broadcast %cst_29 : f32 to vector<8x1xf32>
      %c0_30 = arith.constant 0 : index
      %c0_31 = arith.constant 0 : index
      %45 = vector.load %arg9[%c0_30, %c0_31] : memref<8x1xf32, #tpu.memory_space<vmem>>, vector<8x1xf32>
      tpu.vector_store %arg9[%c0_30, %c0_31], %44 {strides = array<i32>} : memref<8x1xf32, #tpu.memory_space<vmem>>, vector<8x1xf32>,
      %cst_32 = arith.constant 0.000000e+00 : f32
      %46 = vector.broadcast %cst_32 : f32 to vector<8x1xf32>
      %c0_33 = arith.constant 0 : index
      %c0_34 = arith.constant 0 : index
      %47 = vector.load %arg10[%c0_33, %c0_34] : memref<8x1xf32, #tpu.memory_space<vmem>>, vector<8x1xf32>
      tpu.vector_store %arg10[%c0_33, %c0_34], %46 {strides = array<i32>} : memref<8x1xf32, #tpu.memory_space<vmem>>, vector<8x1xf32>,
    } else {
    }
    %c0 = arith.constant 0 : index
    %c0_1 = arith.constant 0 : index
    %3 = vector.load %arg2[%c0, %c0_1] : memref<8x128xbf16, #tpu.memory_space<vmem>>, vector<8x128xbf16>
    %c0_2 = arith.constant 0 : index
    %c0_3 = arith.constant 0 : index
    %4 = vector.load %arg5[%c0_2, %c0_3] : memref<128x128xbf16, #tpu.memory_space<vmem>>, vector<128x128xbf16>
    %cst = arith.constant dense<0.000000e+00> : vector<8x128xf32>
    %5 = tpu.matmul %3, %4, %cst {dimension_numbers = #tpu.dot_dimension_numbers<[1], [0], [0], [1], [0, 0, 1, 1], [], []>} : vector<8x128xbf16>, vector<128x128xbf16>, vector<8x128xf32> -> vector<8x128xf32>
    %c0_4 = arith.constant 0 : index
    %c0_5 = arith.constant 0 : index
    %6 = vector.load %arg6[%c0_4, %c0_5] : memref<1x128xf32, #tpu.memory_space<vmem>>, vector<1x128xf32>
    %7 = vector.broadcast %6 : vector<1x128xf32> to vector<8x128xf32>
    %8 = arith.addf %5, %7 : vector<8x128xf32>
    %c0_6 = arith.constant 0 : index
    %c0_7 = arith.constant 0 : index
    %9 = vector.load %arg8[%c0_6, %c0_7] : memref<8x1xf32, #tpu.memory_space<vmem>>, vector<8x1xf32>
    %cst_8 = arith.constant dense<0xFF800000> : vector<8xf32>
    %10 = vector.multi_reduction <maximumf>, %8, %cst_8 [1] : vector<8x128xf32> to vector<8xf32>
    %11 = vector.shape_cast %10 : vector<8xf32> to vector<8x1xf32>
    %12 = arith.maximumf %9, %11 : vector<8x1xf32>
    %c0_9 = arith.constant 0 : index
    %c0_10 = arith.constant 0 : index
    %13 = vector.load %arg9[%c0_9, %c0_10] : memref<8x1xf32, #tpu.memory_space<vmem>>, vector<8x1xf32>
    %14 = arith.subf %9, %12 : vector<8x1xf32>
    %15 = math.exp %14 : vector<8x1xf32>
    %16 = arith.mulf %13, %15 : vector<8x1xf32>
    %17 = vector.broadcast %12 : vector<8x1xf32> to vector<8x128xf32>
    %18 = arith.subf %8, %17 : vector<8x128xf32>
    %19 = math.exp %18 : vector<8x128xf32>
    %cst_11 = arith.constant dense<0.000000e+00> : vector<8xf32>
    %20 = vector.multi_reduction <add>, %19, %cst_11 [1] : vector<8x128xf32> to vector<8xf32>
    %21 = vector.shape_cast %20 : vector<8xf32> to vector<8x1xf32>
    %22 = arith.addf %16, %21 : vector<8x1xf32>
    %c0_12 = arith.constant 0 : index
    %c0_13 = arith.constant 0 : index
    %23 = vector.load %arg9[%c0_12, %c0_13] : memref<8x1xf32, #tpu.memory_space<vmem>>, vector<8x1xf32>
    tpu.vector_store %arg9[%c0_12, %c0_13], %22 {strides = array<i32>} : memref<8x1xf32, #tpu.memory_space<vmem>>, vector<8x1xf32>,
    %c0_14 = arith.constant 0 : index
    %c0_15 = arith.constant 0 : index
    %24 = vector.load %arg8[%c0_14, %c0_15] : memref<8x1xf32, #tpu.memory_space<vmem>>, vector<8x1xf32>
    tpu.vector_store %arg8[%c0_14, %c0_15], %12 {strides = array<i32>} : memref<8x1xf32, #tpu.memory_space<vmem>>, vector<8x1xf32>,
    %c0_16 = arith.constant 0 : index
    %c0_17 = arith.constant 0 : index
    %25 = vector.load %arg3[%c0_16, %c0_17] : memref<8x1xi32, #tpu.memory_space<vmem>>, vector<8x1xi32>
    %c128_i32 = arith.constant 128 : i32
    %26 = arith.muli %arg1, %c128_i32 : i32
    %27 = vector.broadcast %26 : i32 to vector<8x1xi32>
    %28 = arith.subi %25, %27 : vector<8x1xi32>
    %29 = tpu.iota {dimensions = array<i32: 1>} : vector<8x128xi32>
    %c0_18 = arith.constant 0 : index
    %c0_19 = arith.constant 0 : index
    %30 = vector.load %arg10[%c0_18, %c0_19] : memref<8x1xf32, #tpu.memory_space<vmem>>, vector<8x1xf32>
    %31 = vector.broadcast %28 : vector<8x1xi32> to vector<8x128xi32>
    %32 = arith.cmpi eq, %29, %31 : vector<8x128xi32>
    %cst_20 = arith.constant 0.000000e+00 : f32
    %33 = vector.broadcast %cst_20 : f32 to vector<8x128xf32>
    %34 = arith.select %32, %8, %33 : vector<8x128xi1>, vector<8x128xf32>
    %cst_21 = arith.constant dense<0.000000e+00> : vector<8xf32>
    %35 = vector.multi_reduction <add>, %34, %cst_21 [1] : vector<8x128xf32> to vector<8xf32>
    %36 = vector.shape_cast %35 : vector<8xf32> to vector<8x1xf32>
    %37 = arith.addf %30, %36 : vector<8x1xf32>
    %c0_22 = arith.constant 0 : index
    %c0_23 = arith.constant 0 : index
    %38 = vector.load %arg10[%c0_22, %c0_23] : memref<8x1xf32, #tpu.memory_space<vmem>>, vector<8x1xf32>
    tpu.vector_store %arg10[%c0_22, %c0_23], %37 {strides = array<i32>} : memref<8x1xf32, #tpu.memory_space<vmem>>, vector<8x1xf32>,
    %c0_i32_24 = arith.constant 0 : i32
    %39 = arith.cmpi eq, %arg1, %c0_i32_24 : i32
    %40 = arith.extui %39 : i1 to i32
    %c0_i32_25 = arith.constant 0 : i32
    %41 = arith.cmpi ne, %40, %c0_i32_25 : i32
    scf.if %41 {
      %c0_26 = arith.constant 0 : index
      %c0_27 = arith.constant 0 : index
      %42 = vector.load %arg8[%c0_26, %c0_27] : memref<8x1xf32, #tpu.memory_space<vmem>>, vector<8x1xf32>
      %c0_28 = arith.constant 0 : index
      %c0_29 = arith.constant 0 : index
      %43 = vector.load %arg9[%c0_28, %c0_29] : memref<8x1xf32, #tpu.memory_space<vmem>>, vector<8x1xf32>
      %44 = math.log %43 : vector<8x1xf32>
      %45 = arith.addf %42, %44 : vector<8x1xf32>
      %c0_30 = arith.constant 0 : index
      %c0_31 = arith.constant 0 : index
      %46 = vector.load %arg10[%c0_30, %c0_31] : memref<8x1xf32, #tpu.memory_space<vmem>>, vector<8x1xf32>
      %47 = arith.subf %45, %46 : vector<8x1xf32>
      %c0_32 = arith.constant 0 : index
      %c0_33 = arith.constant 0 : index
      %48 = vector.load %arg4[%c0_32, %c0_33] : memref<8x1xf32, #tpu.memory_space<vmem>>, vector<8x1xf32>
      %49 = arith.mulf %47, %48 : vector<8x1xf32>
      %cst_34 = arith.constant dense<0.000000e+00> : vector<1xf32>
      %50 = vector.multi_reduction <add>, %49, %cst_34 [0] : vector<8x1xf32> to vector<1xf32>
      %51 = vector.shape_cast %50 : vector<1xf32> to vector<1x1xf32>
      %52 = vector.shape_cast %51 : vector<1x1xf32> to vector<1x1x1xf32>
      %53 = vector.shape_cast %52 : vector<1x1x1xf32> to vector<1x1x1xf32>
      %54 = vector.broadcast %53 : vector<1x1x1xf32> to vector<1x1x128xf32>
      %c0_35 = arith.constant 0 : index
      %c0_36 = arith.constant 0 : index
      %c0_37 = arith.constant 0 : index
      %55 = vector.load %arg7[%c0_35, %c0_36, %c0_37] : memref<1x1x128xf32, #tpu.memory_space<vmem>>, vector<1x1x128xf32>
      tpu.vector_store %arg7[%c0_35, %c0_36, %c0_37], %54 {strides = array<i32>} : memref<1x1x128xf32, #tpu.memory_space<vmem>>, vector<1x1x128xf32>,
    } else {
    }
    return
  }
  func.func @transform_0(%arg0: i32, %arg1: i32) -> (i32, i32) {
    %c0_i32 = arith.constant 0 : i32
    %c0_i32_0 = arith.constant 0 : i32
    return %arg0, %c0_i32 : i32, i32
  }
  func.func @transform_1(%arg0: i32, %arg1: i32) -> (i32, i32) {
    %c0_i32 = arith.constant 0 : i32
    %c0_i32_0 = arith.constant 0 : i32
    return %arg0, %c0_i32 : i32, i32
  }
  func.func @transform_2(%arg0: i32, %arg1: i32) -> (i32, i32) {
    %c0_i32 = arith.constant 0 : i32
    %c0_i32_0 = arith.constant 0 : i32
    return %arg0, %c0_i32 : i32, i32
  }
  func.func @transform_3(%arg0: i32, %arg1: i32) -> (i32, i32) {
    %c0_i32 = arith.constant 0 : i32
    %c0_i32_0 = arith.constant 0 : i32
    %c0_i32_1 = arith.constant 0 : i32
    return %c0_i32, %c0_i32_0 : i32, i32
  }
  func.func @transform_4(%arg0: i32, %arg1: i32) -> (i32, i32) {
    %c0_i32 = arith.constant 0 : i32
    %c0_i32_0 = arith.constant 0 : i32
    %c0_i32_1 = arith.constant 0 : i32
    return %c0_i32, %c0_i32_0 : i32, i32
  }
  func.func @transform_5(%arg0: i32, %arg1: i32) -> (i32, i32, i32) {
    %c0_i32 = arith.constant 0 : i32
    %c0_i32_0 = arith.constant 0 : i32
    %c0_i32_1 = arith.constant 0 : i32
    return %arg0, %c0_i32, %c0_i32_0 : i32, i32, i32
  }
}

</mosaic_0001>

<llo_original>
// kernel: _lambda_.3
$region0: #{_lambda_.3}
  #allocation0 [shape = 'u32[]', space=smem, size = 0x4, offset = 0x4, fixed_abs, tag = 'smem constant byte address 0x4 - core index']
  #allocation1 [shape = 'u32[144,128]{1,0:T(1,128)}', space=vmem, size = 0x12000, scoped, tag = 'internal scratch']
  #allocation2 [shape = 'f32[8,1]{1,0:T(8,128)}', space=vmem, size = 0x1000, scoped, tag = 'scratch operand']
  #allocation3 [shape = 'f32[8,1]{1,0:T(8,128)}', space=vmem, size = 0x1000, scoped, tag = 'scratch operand']
  #allocation4 [shape = 'f32[8,1]{1,0:T(8,128)}', space=vmem, size = 0x1000, scoped, tag = 'scratch operand']
  %s0 = inlined_call_operand.vmem [shape: bf16[8,128], index: 0, kind: input, shape index: {}]
  %s1 = inlined_call_operand.vmem [shape: s32[8,1], index: 1, kind: input, shape index: {}]
  %s2 = inlined_call_operand.vmem [shape: f32[8,1], index: 2, kind: input, shape index: {}]
  %s3 = inlined_call_operand.vmem [shape: bf16[128,128], index: 3, kind: input, shape index: {}]
  %s4 = inlined_call_operand.vmem [shape: f32[1,128], index: 4, kind: input, shape index: {}]
  %s5 = inlined_call_operand.vmem [shape: f32[1,1,128], index: 5, kind: output, shape index: {}]
  %s6 = sld [smem:[#allocation0]]
  $region38: #{_lambda_.3} parent=0
    _
  %s8 = ssub.s32 1, %s6
  %s9 = scalar_select 0, %s8, %s6
  // Predicated region
  $region2: #{_lambda_.3} parent=0 // pred_check
    _
  $region3: #{_lambda_.3} parent=0 // pred_check_branch
    %11 = sbr.rel (0) target = $region5
  $region4: #{_lambda_.3} parent=0 // pred_region
    _
  $region5: #{_lambda_.3} parent=0 // pred_fallthru
    _
  // Predicated region
  $region6: #{_lambda_.3} parent=0 // pred_check
    _
  $region7: #{_lambda_.3} parent=0 // pred_check_branch
    %13 = sbr.rel (0) target = $region9
  $region8: #{_lambda_.3} parent=0 // pred_region
    _
  $region9: #{_lambda_.3} parent=0 // pred_fallthru
    _
  // Predicated region
  $region10: #{_lambda_.3} parent=0 // pred_check
    _
  $region11: #{_lambda_.3} parent=0 // pred_check_branch
    %15 = sbr.rel (0) target = $region13
  $region12: #{_lambda_.3} parent=0 // pred_region
    _
  $region13: #{_lambda_.3} parent=0 // pred_fallthru
    _
  // Predicated region
  $region14: #{_lambda_.3} parent=0 // pred_check
    _
  $region15: #{_lambda_.3} parent=0 // pred_check_branch
    %17 = sbr.rel (0) target = $region17
  $region16: #{_lambda_.3} parent=0 // pred_region
    _
  $region17: #{_lambda_.3} parent=0 // pred_fallthru
    _
  // Predicated region
  $region18: #{_lambda_.3} parent=0 // pred_check
    _
  $region19: #{_lambda_.3} parent=0 // pred_check_branch
    %19 = sbr.rel (0) target = $region21
  $region20: #{_lambda_.3} parent=0 // pred_region
    _
  $region21: #{_lambda_.3} parent=0 // pred_fallthru
    _
  %p21 = scmp.eq.s32.totalorder 0, 0
  // Predicated region
  $region22: #{_lambda_.3} parent=0 // pred_check
    %p22 = pneg %p21
  $region23: #{_lambda_.3} parent=0 // pred_check_branch
    %24 = sbr.rel (%p22) target = $region25
  $region24: #{_lambda_.3} parent=0 // pred_region
    %vm25 = vcmask 7168
    %26 = vst.msk [vmem:[#allocation2] sm:$0xff] %vm25, -1e+30
    %27 = vst.msk [vmem:[#allocation3] sm:$0xff] %vm25, 0.0
    %28 = vst.msk [vmem:[#allocation4] sm:$0xff] %vm25, 0.0
  $region25: #{_lambda_.3} parent=0 // pred_fallthru
    _
  %v29 = vld [vmem:[%s0] sm:$0xf]
  %v30 = vld [vmem:[%s3] sm:$0xf]
  %v31 = vld [vmem:[%s3 + $0x4] sm:$0xf]
  %v32 = vld [vmem:[%s3 + $0x8] sm:$0xf]
  %v33 = vld [vmem:[%s3 + $0xc] sm:$0xf]
  %v34 = vld [vmem:[%s3 + $0x10] sm:$0xf]
  %v35 = vld [vmem:[%s3 + $0x14] sm:$0xf]
  %v36 = vld [vmem:[%s3 + $0x18] sm:$0xf]
  %v37 = vld [vmem:[%s3 + $0x1c] sm:$0xf]
  %v38 = vld [vmem:[%s3 + $0x20] sm:$0xf]
  %v39 = vld [vmem:[%s3 + $0x24] sm:$0xf]
  %v40 = vld [vmem:[%s3 + $0x28] sm:$0xf]
  %v41 = vld [vmem:[%s3 + $0x2c] sm:$0xf]
  %v42 = vld [vmem:[%s3 + $0x30] sm:$0xf]
  %v43 = vld [vmem:[%s3 + $0x34] sm:$0xf]
  %v44 = vld [vmem:[%s3 + $0x38] sm:$0xf]
  %v45 = vld [vmem:[%s3 + $0x3c] sm:$0xf]
  %v46 = vld [vmem:[%s4] sm:$0x1]
  %v48 = vlaneseq
  %v49 = vshrl.u32 %v48, 7
  %v50 = vsub.s32 0, %v49
  %v51 = vrot.slane %v46, %v50
  %v69 = vunpack.c.l.b16 %v30
  %v70 = vunpack.c.l.b16 %v31
  %v71 = vunpack.c.l.b16 %v32
  %v72 = vunpack.c.l.b16 %v33
  %v73 = vunpack.c.l.b16 %v34
  %v74 = vunpack.c.l.b16 %v35
  %v75 = vunpack.c.l.b16 %v36
  %v76 = vunpack.c.l.b16 %v37
  %v77 = vunpack.c.l.b16 %v38
  %v78 = vunpack.c.l.b16 %v39
  %v79 = vunpack.c.l.b16 %v40
  %v80 = vunpack.c.l.b16 %v41
  %v81 = vunpack.c.l.b16 %v42
  %v82 = vunpack.c.l.b16 %v43
  %v83 = vunpack.c.l.b16 %v44
  %v84 = vunpack.c.l.b16 %v45
  %v85 = vpack.c.b16 %v70, %v69
  %v86 = vpack.c.b16 %v72, %v71
  %v87 = vpack.c.b16 %v74, %v73
  %v88 = vpack.c.b16 %v76, %v75
  %v89 = vpack.c.b16 %v78, %v77
  %v90 = vpack.c.b16 %v80, %v79
  %v91 = vpack.c.b16 %v82, %v81
  %v92 = vpack.c.b16 %v84, %v83
  %101 = vmatprep.subr.bf16.mxu0 0
  %102 = vmatpush1.bf16.msra.mxu0 %v85
  %103 = vmatprep.subr.bf16.mxu0 0
  %104 = vmatpush1.bf16.msra.mxu0 %v86
  %105 = vmatprep.subr.bf16.mxu0 0
  %106 = vmatpush1.bf16.msra.mxu0 %v87
  %107 = vmatprep.subr.bf16.mxu0 0
  %108 = vmatpush1.bf16.msra.mxu0 %v88
  %109 = vmatprep.subr.bf16.mxu0 0
  %110 = vmatpush1.bf16.msra.mxu0 %v89
  %111 = vmatprep.subr.bf16.mxu0 0
  %112 = vmatpush1.bf16.msra.mxu0 %v90
  %113 = vmatprep.subr.bf16.mxu0 0
  %114 = vmatpush1.bf16.msra.mxu0 %v91
  %115 = vmatprep.subr.bf16.mxu0 0
  %116 = vmatpush1.bf16.msra.mxu0 %v92
  %117 = vmatprep.subr.bf16.mxu0 0
  %118 = vmatpush1.bf16.msra.mxu0 0
  %119 = vmatprep.subr.bf16.mxu0 0
  %120 = vmatpush1.bf16.msra.mxu0 0
  %121 = vmatprep.subr.bf16.mxu0 0
  %122 = vmatpush1.bf16.msra.mxu0 0
  %123 = vmatprep.subr.bf16.mxu0 0
  %124 = vmatpush1.bf16.msra.mxu0 0
  %125 = vmatprep.subr.bf16.mxu0 0
  %126 = vmatpush1.bf16.msra.mxu0 0
  %127 = vmatprep.subr.bf16.mxu0 0
  %128 = vmatpush1.bf16.msra.mxu0 0
  %129 = vmatprep.subr.bf16.mxu0 0
  %130 = vmatpush1.bf16.msra.mxu0 0
  %131 = vmatprep.subr.bf16.mxu0 0
  %132 = vmatpush1.bf16.msra.mxu0 0
  %133 = vmatprep.mubr.bf16.mxu0 0
  %134 = vmatmul.mubr.bf16.gmra.mrb[0].mxu0 %v29
  %v135 = vpop.f32.mrb[0].mxu0
  %v136 = vadd.f32 %v51, %v135
  %v137 = vpop.f32.mrb[0].mxu0
  %v138 = vpop.f32.mrb[0].mxu0
  %v139 = vpop.f32.mrb[0].mxu0
  %140 = vdwg.mxu0
  %v141 = vld [vmem:[#allocation2] sm:$0xff]
  %142 = vmax.xlane.f32.xlu0 %v136
  %v143 = vpop.xlane.xlu0 %142
  %v144 = vmax.f32 %v141, %v143
  %v145 = vld [vmem:[#allocation3] sm:$0xff]
  %v146 = vsub.f32 %v141, %v144
  %v147 = vmul.f32 %v146, 1.442695
  %v148 = vpow.pop %v147
  %v149 = vmul.f32 %v145, %v148
  %151 = vset.pattern.permute.xlu0 0
  %152 = vperm.xlu0 %151, %v144
  %v153 = vpop.permute.xlu0 %152
  %v155 = vsub.f32 %v136, %v153
  %v156 = vmul.f32 %v155, 1.442695
  %v157 = vpow.pop %v156
  %158 = vadd.xlane.f32.xlu0 %v157
  %v159 = vpop.xlane.xlu0 %158
  %v160 = vadd.f32 %v149, %v159
  %vm161 = vcmask 7168
  %162 = vst.msk [vmem:[#allocation3] sm:$0xff] %vm161, %v160
  %163 = vst.msk [vmem:[#allocation2] sm:$0xff] %vm161, %v144
  %v164 = vld [vmem:[%s1] sm:$0xff]
  %s165 = smul.u32 0, 128
  %v166 = vstv %s165
  %v167 = vsub.s32 %v164, %v166
  %v168 = vlaneseq
  %v169 = vand.u32 %v168, 127
  %v170 = vld [vmem:[#allocation4] sm:$0xff]
  %171 = vset.pattern.permute.xlu0 0
  %172 = vperm.xlu0 %171, %v167
  %v173 = vpop.permute.xlu0 %172
  %vm174 = vcmp.eq.s32.totalorder %v169, %v173
  %v175 = vsel %vm174, %v136, 0.0
  %176 = vadd.xlane.f32.xlu0 %v175
  %v177 = vpop.xlane.xlu0 %176
  %v178 = vadd.f32 %v170, %v177
  %179 = vst.msk [vmem:[#allocation4] sm:$0xff] %vm161, %v178
  // Predicated region
  $region26: #{_lambda_.3} parent=0 // pred_check
    %p180 = pneg %p21
  $region27: #{_lambda_.3} parent=0 // pred_check_branch
    %182 = sbr.rel (%p180) target = $region29
  $region28: #{_lambda_.3} parent=0 // pred_region
    %v183 = vld [vmem:[#allocation2] sm:$0xff]
    %v184 = vld [vmem:[#allocation3] sm:$0xff]
    %v185 = vlog2.pop %v184
    %v186 = vmul.f32 %v185, 0.6931472
    %v187 = vadd.f32 %v183, %v186
    %v188 = vld [vmem:[#allocation4] sm:$0xff]
    %v189 = vsub.f32 %v187, %v188
    %v190 = vld [vmem:[%s2] sm:$0xff]
    %v191 = vmul.f32 %v189, %v190
    %v192 = vsel %vm161, %v191, 0.0
    %v193 = vrot.slane %v192, 4
    %v194 = vadd.f32 %v192, %v193
    %v195 = vrot.slane %v194, 2
    %v196 = vadd.f32 %v194, %v195
    %v197 = vrot.slane %v196, 1
    %v198 = vadd.f32 %v196, %v197
    %200 = vset.pattern.permute.xlu0 0
    %201 = vperm.xlu0 %200, %v198
    %v202 = vpop.permute.xlu0 %201
    %204 = vst [vmem:[%s5] sm:$0x1] %v202
  $region29: #{_lambda_.3} parent=0 // pred_fallthru
    _
  // Predicated region
  $region30: #{_lambda_.3} parent=0 // pred_check
    _
  $region31: #{_lambda_.3} parent=0 // pred_check_branch
    %206 = sbr.rel (0) target = $region33
  $region32: #{_lambda_.3} parent=0 // pred_region
    _
  $region33: #{_lambda_.3} parent=0 // pred_fallthru
    _
  // Predicated region
  $region34: #{_lambda_.3} parent=0 // pred_check
    _
  $region35: #{_lambda_.3} parent=0 // pred_check_branch
    %208 = sbr.rel (0) target = $region37
  $region36: #{_lambda_.3} parent=0 // pred_region
    _
  $region37: #{_lambda_.3} parent=0 // pred_fallthru
    _

</llo_original>
